<compile_context>
chip_gen: v7x
topology: tpu7x:2x2x1
jax: 0.10.0
libtpu: 0.0.40
codegen_flags: <defaults>
</compile_context>

<pallas_src>
import functools

import numpy as np
import jax
import jax.numpy as jnp
from jax.experimental import pallas as pl
from jax.experimental.pallas import tpu as pltpu


UP_SCALE = 2            # kernel is specialized to the 2-stage k=4, s=2, p=1 case
CONSTANT_FEATURES = 16

# Sub-pixel decomposition tables for ConvTranspose2d(k=4, stride=2, padding=1):
#   out[2P + R] = sum_A  w[_KH[R][A]] * in[P + _DD[R][A]]   (zero outside input)
_KH = ((1, 3), (0, 2))      # kernel index per (output parity R, tap A)
_DD = ((0, -1), (1, 0))     # input offset per (output parity R, tap A)
_SHIFTS = ((-1, -1), (-1, 0), (-1, 1),
           (0, -1), (0, 0), (0, 1),
           (1, -1), (1, 0), (1, 1))
_PARITIES = ((0, 0), (0, 1), (1, 0), (1, 1))


def _tap(par, r1, a):
    """Stage-1 deconv tap on the interleaved (2H, 2W) grid.

    Returns (stage-0 parity plane, block shift, stage-1 kernel index) for the
    tap `a` of stage-1 output parity `r1`, given the stage-0 parity `par` of
    the output block row/col.
    """
    d, k = _DD[r1][a], _KH[r1][a]
    if d == 0:
        return par, 0, k
    if d == -1:
        return (1, -1, k) if par == 0 else (0, 0, k)
    return (1, 0, k) if par == 0 else (0, 1, k)              # d == +1


# ----------------------------------------------------------------------------
# Fused kernel: both stages of the block for one image.
# ----------------------------------------------------------------------------
def _upconv2_kernel(x_ref, w10_ref, b10_ref, vstk_ref, w1b_ref, sc_ref, o_ref,
                    *, W):
    # x_ref:    (1, Cin, H*W)  input image (flattened NCHW)             [VMEM]
    # w10_ref:  (C0, Cin)      stage-0 1x1 conv weight                  [VMEM]
    # b10_ref:  (C0, 1)        stage-0 1x1 conv bias                    [VMEM]
    # vstk_ref: (36, C0)       fused (stage-0 deconv o stage-1 1x1) weight,
    #                          rows grouped as 9 shifts x 4 parities    [VMEM]
    # w1b_ref:  (16, 36)       stage-1 deconv scalars scattered over
    #                          (shift, input-parity-row) columns        [VMEM]
    # sc_ref:   (2,)           [0]=fused stage-1 conv bias, [1]=deconv bias [SMEM]
    # o_ref:    (1, 16, H*W)   16 output parity planes (rho,R,sig,S)    [VMEM]
    HW = x_ref.shape[2]

    # ---- stage 0: 1x1 conv + ReLU (one lane-dense MXU matmul) ---------------
    y0 = jnp.dot(w10_ref[...], x_ref[0],
                 preferred_element_type=jnp.float32)             # (C0, HW)
    y0 = jnp.maximum(y0 + b10_ref[...], 0.0)

    # Column masks for flattened-plane shifts (plane row length = W).
    col = jax.lax.broadcasted_iota(jnp.int32, (1, HW), 1) % W
    col_mask = {-1: col >= 1, 0: None, 1: col <= W - 2}

    def shifted(arr, dh, dw):
        # Rows of `arr` are flattened (H, W) planes; return rows shifted so
        # out[:, p*W + q] = plane[p + dh, q + dw], zero outside the plane.
        d = dh * W + dw
        c = arr.shape[0]
        if d > 0:
            s = jnp.concatenate(
                [arr[:, d:], jnp.zeros((c, d), arr.dtype)], axis=1)
        elif d < 0:
            s = jnp.concatenate(
                [jnp.zeros((c, -d), arr.dtype), arr[:, :HW + d]], axis=1)
        else:
            s = arr
        m = col_mask[dw]
        return s if m is None else jnp.where(m, s, 0.0)

    # ---- fused [stage-0 ConvTranspose2d  o  stage-1 1x1 conv] + ReLU --------
    # Weights were pre-multiplied host-side (no nonlinearity between the two
    # layers).  One matmul gives, per (shift g, stage-0 output parity p), the
    # plane that shift contributes; the shift is applied AFTER the channel
    # contraction (they commute), so no shifted copies of the 16-channel y0
    # are ever materialized.
    u_all = jnp.dot(vstk_ref[...], y0,
                    preferred_element_type=jnp.float32)          # (36, HW)
    acc = None
    for g, (dh, dw) in enumerate(_SHIFTS):
        t = shifted(u_all[4 * g:4 * g + 4, :], dh, dw)
        acc = t if acc is None else acc + t
    y1 = jnp.maximum(acc + sc_ref[0], 0.0)                       # (4, HW)

    # ---- stage-1 ConvTranspose2d(1->1, k=4, s=2, p=1) -----------------------
    # y1's real grid is (2H, 2W) interleaved from its 4 parity rows.  Stack the
    # 9 block-shifted copies of y1 and hit them with one (16, 36) matmul whose
    # scalar entries place each 4x4 tap; the result rows are the 16 output
    # parity planes, stored lane-dense in one go.
    ystk = jnp.concatenate([shifted(y1, dh, dw) for dh, dw in _SHIFTS],
                           axis=0)                               # (36, HW)
    o_ref[0] = jnp.dot(w1b_ref[...], ystk,
                       preferred_element_type=jnp.float32) + sc_ref[1]


# ----------------------------------------------------------------------------
# Parameters (torch layout) + one-time kernel-layout preparation
# ----------------------------------------------------------------------------
def init_params(key, in_features, up_scale=UP_SCALE):
    """torch-layout parameters for UpConvBlock(in_features, up_scale)."""
    params = []
    in_f = in_features
    k = 2 ** up_scale
    for i in range(up_scale):
        out_f = 1 if i == up_scale - 1 else CONSTANT_FEATURES
        key, k1, k2, k3, k4 = jax.random.split(key, 5)
        w1 = jax.random.normal(k1, (out_f, in_f, 1, 1), jnp.float32) * 0.1
        b1 = jax.random.normal(k2, (out_f,), jnp.float32) * 0.1
        wt = jax.random.normal(k3, (out_f, out_f, k, k), jnp.float32) * 0.1
        bt = jax.random.normal(k4, (out_f,), jnp.float32) * 0.1
        params.append((w1, b1, wt, bt))
        in_f = out_f
    return params


def prepare_params(params):
    """One-time re-layout + algebraic fusion of torch-style params (host-side)."""
    (w1_0, b1_0, wt0, bt0), (w1_1, b1_1, wt1, bt1) = params
    c0 = w1_0.shape[0]                                          # 16

    # stage-0 1x1 conv
    w10 = jnp.asarray(np.asarray(w1_0, np.float32)[:, :, 0, 0])  # (C0, Cin)
    b10 = jnp.asarray(np.asarray(b1_0, np.float32).reshape(c0, 1))

    # Fuse the stage-1 1x1 conv into the stage-0 deconv weights:
    #   wtf[ci, kh, kw] = sum_co wt0[ci, co, kh, kw] * w11[co]
    w11 = np.asarray(w1_1, np.float32)[0, :, 0, 0]              # (C0,)
    wtf = np.einsum('iokl,o->ikl', np.asarray(wt0, np.float32), w11)   # (C0,4,4)
    bf = float(np.dot(np.asarray(bt0, np.float32), w11)
               + np.asarray(b1_1, np.float32)[0])

    # vstk[4*g + p] = fused weight row for shift g and stage-0 output parity p.
    vstk = np.zeros((len(_SHIFTS) * 4, c0), np.float32)
    for g, (dh, dw) in enumerate(_SHIFTS):
        for p, (r, s) in enumerate(_PARITIES):
            a = next((i for i in range(2) if _DD[r][i] == dh), None)
            b = next((i for i in range(2) if _DD[s][i] == dw), None)
            if a is None or b is None:
                continue
            vstk[4 * g + p, :] = wtf[:, _KH[r][a], _KH[s][b]]

    # w1big[o, 4*g + row]: stage-1 deconv scalar taps scattered onto
    # (shift index, input-parity-row) for output plane o = (rho, R, sig, S).
    wt1k = np.asarray(wt1, np.float32)[0, 0]                    # (4, 4)
    shift_idx = {sdw: i for i, sdw in enumerate(_SHIFTS)}
    w1big = np.zeros((16, len(_SHIFTS) * 4), np.float32)
    for rho in range(2):
        for big_r in range(2):
            for sig in range(2):
                for big_s in range(2):
                    o = ((rho * 2 + big_r) * 2 + sig) * 2 + big_s
                    for a in range(2):
                        for b in range(2):
                            pr, dh, kh = _tap(rho, big_r, a)
                            pc, dw, kw = _tap(sig, big_s, b)
                            g = shift_idx[(dh, dw)]
                            w1big[o, 4 * g + pr * 2 + pc] += wt1k[kh, kw]

    sc = jnp.asarray([bf, float(np.asarray(bt1, np.float32)[0])], jnp.float32)
    return dict(w10=w10, b10=b10, vstk=jnp.asarray(vstk),
                w1big=jnp.asarray(w1big), sc=sc)


# ----------------------------------------------------------------------------
# Forward: one fused pallas_call + tiny final interleave
# ----------------------------------------------------------------------------
def upconv_block_forward(x_nchw, prep):
    N, Cin, H, W = x_nchw.shape
    HW = H * W
    c0 = prep["w10"].shape[0]
    nsh = prep["vstk"].shape[0]                                  # 36
    x_flat = x_nchw.reshape(N, Cin, HW).astype(jnp.float32)

    out_flat = pl.pallas_call(
        functools.partial(_upconv2_kernel, W=W),
        out_shape=jax.ShapeDtypeStruct((N, 16, HW), jnp.float32),
        grid=(N,),
        in_specs=[
            pl.BlockSpec((1, Cin, HW), lambda n: (n, 0, 0)),
            pl.BlockSpec((c0, Cin), lambda n: (0, 0)),
            pl.BlockSpec((c0, 1), lambda n: (0, 0)),
            pl.BlockSpec((nsh, c0), lambda n: (0, 0)),
            pl.BlockSpec((16, nsh), lambda n: (0, 0)),
            pl.BlockSpec(memory_space=pltpu.MemorySpace.SMEM),
        ],
        out_specs=pl.BlockSpec((1, 16, HW), lambda n: (n, 0, 0)),
        compiler_params=pltpu.CompilerParams(
            dimension_semantics=("parallel",)),
    )(x_flat, prep["w10"], prep["b10"], prep["vstk"], prep["w1big"], prep["sc"])

    # Final parity interleave (tiny tensor):
    #   out[n, 0, 4p + 2*rho + R, 4q + 2*sig + S]
    #     = out_flat[n, ((rho*2 + R)*2 + sig)*2 + S, p*W + q]
    out = (out_flat.reshape(N, 2, 2, 2, 2, H, W)
           .transpose(0, 5, 1, 2, 6, 3, 4)
           .reshape(N, 1, 4 * H, 4 * W))
    return out


# ----------------------------------------------------------------------------
# Pure-JAX reference (correctness check only)
# ----------------------------------------------------------------------------
def reference_forward(x_nchw, params, up_scale=UP_SCALE):
    pad = [0, 0, 1, 3, 7][up_scale]
    k = 2 ** up_scale
    y = x_nchw.astype(jnp.float32)
    dn = ("NCHW", "OIHW", "NCHW")
    for (w1, b1, wt, bt) in params:
        y = jax.lax.conv_general_dilated(y, w1, (1, 1), "VALID",
                                         dimension_numbers=dn)
        y = jnp.maximum(y + b1[None, :, None, None], 0.0)
        w_t = jnp.flip(wt, axis=(2, 3)).transpose(1, 0, 2, 3)   # (Cout,Cin,k,k)
        y = jax.lax.conv_general_dilated(
            y, w_t, (1, 1),
            padding=[(k - 1 - pad, k - 1 - pad)] * 2,
            lhs_dilation=(2, 2),
            dimension_numbers=dn)
        y = y + bt[None, :, None, None]
    return y


if __name__ == "__main__":
    key = jax.random.PRNGKey(0)
    key, kx = jax.random.split(key)

    N, Cin, H, W = 2, 4, 16, 16
    x = jax.random.normal(kx, (N, Cin, H, W), jnp.float32)

    params = init_params(key, in_features=Cin, up_scale=UP_SCALE)
    prep = prepare_params(params)      # weight re-layout/fusion done once

    fwd = jax.jit(upconv_block_forward)
    out = jax.block_until_ready(fwd(x, prep))

    ref = jax.block_until_ready(reference_forward(x, params))

    assert out.shape == (N, 1, H * 4, W * 4), out.shape
    assert jnp.allclose(out, ref, atol=1e-4, rtol=1e-4), (
        float(jnp.max(jnp.abs(out - ref))))

    print("KERNEL_OK")
</pallas_src>

<mosaic_0001>
module attributes {stable_mosaic.version = 11 : i64} {
  func.func @_upconv2_kernel(%arg0: i32, %arg1: memref<1x4x256xf32, #tpu.memory_space<vmem>>, %arg2: memref<16x4xf32, #tpu.memory_space<vmem>>, %arg3: memref<16x1xf32, #tpu.memory_space<vmem>>, %arg4: memref<36x16xf32, #tpu.memory_space<vmem>>, %arg5: memref<16x36xf32, #tpu.memory_space<vmem>>, %arg6: memref<2xf32, #tpu.memory_space<smem>>, %arg7: memref<1x16x256xf32, #tpu.memory_space<vmem>>) attributes {dimension_semantics = [#tpu.dimension_semantics<parallel>], iteration_bounds = array<i64: 2>, scalar_prefetch = 0 : i64, scratch_operands = 0 : i64, tpu.core_type = #tpu.core_type<tc>, window_params = [{transform_indices = @transform_0, window_bounds = array<i64: 1, 4, 256>}, {pipeline_mode = #tpu.pipeline_mode<synchronous>, transform_indices = @transform_1, window_bounds = array<i64: 16, 4>}, {pipeline_mode = #tpu.pipeline_mode<synchronous>, transform_indices = @transform_2, window_bounds = array<i64: 16, 1>}, {pipeline_mode = #tpu.pipeline_mode<synchronous>, transform_indices = @transform_3, window_bounds = array<i64: 36, 16>}, {pipeline_mode = #tpu.pipeline_mode<synchronous>, transform_indices = @transform_4, window_bounds = array<i64: 16, 36>}, {transform_indices = @transform_5, window_bounds = array<i64: 2>}, {transform_indices = @transform_6, window_bounds = array<i64: 1, 16, 256>}]} {
    %c0 = arith.constant 0 : index
    %c0_0 = arith.constant 0 : index
    %0 = vector.load %arg2[%c0, %c0_0] : memref<16x4xf32, #tpu.memory_space<vmem>>, vector<16x4xf32>
    %c0_1 = arith.constant 0 : index
    %c0_2 = arith.constant 0 : index
    %c0_3 = arith.constant 0 : index
    %1 = vector.load %arg1[%c0_1, %c0_2, %c0_3] : memref<1x4x256xf32, #tpu.memory_space<vmem>>, vector<1x4x256xf32>
    %2 = vector.shape_cast %1 : vector<1x4x256xf32> to vector<4x256xf32>
    %cst = arith.constant dense<0.000000e+00> : vector<16x256xf32>
    %3 = tpu.matmul %0, %2, %cst {dimension_numbers = #tpu.dot_dimension_numbers<[1], [0], [0], [1], [0, 0, 1, 1], [], []>} : vector<16x4xf32>, vector<4x256xf32>, vector<16x256xf32> -> vector<16x256xf32>
    %c0_4 = arith.constant 0 : index
    %c0_5 = arith.constant 0 : index
    %4 = vector.load %arg3[%c0_4, %c0_5] : memref<16x1xf32, #tpu.memory_space<vmem>>, vector<16x1xf32>
    %5 = vector.broadcast %4 : vector<16x1xf32> to vector<16x256xf32>
    %6 = arith.addf %3, %5 : vector<16x256xf32>
    %cst_6 = arith.constant 0.000000e+00 : f32
    %7 = vector.broadcast %cst_6 : f32 to vector<16x256xf32>
    %8 = arith.maximumf %6, %7 : vector<16x256xf32>
    %9 = tpu.iota {dimensions = array<i32: 1>} : vector<1x256xi32>
    %c16_i32 = arith.constant 16 : i32
    %c0_i32 = arith.constant 0 : i32
    %10 = arith.cmpi eq, %c16_i32, %c0_i32 : i32
    %c1_i32 = arith.constant 1 : i32
    %11 = arith.select %10, %c1_i32, %c16_i32 : i32
    %12 = vector.broadcast %11 : i32 to vector<1x256xi32>
    %13 = arith.remsi %9, %12 : vector<1x256xi32>
    %c0_i32_7 = arith.constant 0 : i32
    %14 = vector.broadcast %c0_i32_7 : i32 to vector<1x256xi32>
    %15 = arith.cmpi ne, %13, %14 : vector<1x256xi32>
    %c0_i32_8 = arith.constant 0 : i32
    %16 = vector.broadcast %c0_i32_8 : i32 to vector<1x256xi32>
    %17 = arith.cmpi slt, %13, %16 : vector<1x256xi32>
    %c0_i32_9 = arith.constant 0 : i32
    %18 = arith.cmpi slt, %11, %c0_i32_9 : i32
    %19 = vector.broadcast %18 : i1 to vector<1x256xi1>
    %20 = vector.broadcast %19 : vector<1x256xi1> to vector<1x256xi1>
    %21 = arith.xori %17, %20 : vector<1x256xi1>
    %22 = arith.andi %21, %15 : vector<1x256xi1>
    %23 = vector.broadcast %11 : i32 to vector<1x256xi32>
    %24 = arith.addi %13, %23 : vector<1x256xi32>
    %25 = arith.select %22, %24, %13 : vector<1x256xi1>, vector<1x256xi32>
    %c1_i32_10 = arith.constant 1 : i32
    %26 = vector.broadcast %c1_i32_10 : i32 to vector<1x256xi32>
    %27 = arith.cmpi sge, %25, %26 : vector<1x256xi32>
    %c14_i32 = arith.constant 14 : i32
    %28 = vector.broadcast %c14_i32 : i32 to vector<1x256xi32>
    %29 = arith.cmpi sle, %25, %28 : vector<1x256xi32>
    %c0_11 = arith.constant 0 : index
    %c0_12 = arith.constant 0 : index
    %30 = vector.load %arg4[%c0_11, %c0_12] : memref<36x16xf32, #tpu.memory_space<vmem>>, vector<36x16xf32>
    %cst_13 = arith.constant dense<0.000000e+00> : vector<36x256xf32>
    %31 = tpu.matmul %30, %8, %cst_13 {dimension_numbers = #tpu.dot_dimension_numbers<[1], [0], [0], [1], [0, 0, 1, 1], [], []>} : vector<36x16xf32>, vector<16x256xf32>, vector<36x256xf32> -> vector<36x256xf32>
    %32 = vector.extract_strided_slice %31 {offsets = [0, 0], sizes = [4, 256], strides = [1, 1]} : vector<36x256xf32> to vector<4x256xf32>
    %cst_14 = arith.constant 0.000000e+00 : f32
    %33 = vector.broadcast %cst_14 : f32 to vector<4x17xf32>
    %34 = vector.extract_strided_slice %32 {offsets = [0, 0], sizes = [4, 239], strides = [1, 1]} : vector<4x256xf32> to vector<4x239xf32>
    %35 = tpu.concatenate %33, %34 in 1 : vector<4x17xf32>, vector<4x239xf32> -> vector<4x256xf32>
    %cst_15 = arith.constant 0.000000e+00 : f32
    %36 = vector.shape_cast %27 : vector<1x256xi1> to vector<1x256xi1>
    %37 = vector.broadcast %36 : vector<1x256xi1> to vector<4x256xi1>
    %38 = vector.broadcast %cst_15 : f32 to vector<4x256xf32>
    %39 = arith.select %37, %35, %38 : vector<4x256xi1>, vector<4x256xf32>
    %40 = vector.extract_strided_slice %31 {offsets = [4, 0], sizes = [4, 256], strides = [1, 1]} : vector<36x256xf32> to vector<4x256xf32>
    %cst_16 = arith.constant 0.000000e+00 : f32
    %41 = vector.broadcast %cst_16 : f32 to vector<4x16xf32>
    %42 = vector.extract_strided_slice %40 {offsets = [0, 0], sizes = [4, 240], strides = [1, 1]} : vector<4x256xf32> to vector<4x240xf32>
    %43 = tpu.concatenate %41, %42 in 1 : vector<4x16xf32>, vector<4x240xf32> -> vector<4x256xf32>
    %44 = arith.addf %39, %43 : vector<4x256xf32>
    %45 = vector.extract_strided_slice %31 {offsets = [8, 0], sizes = [4, 256], strides = [1, 1]} : vector<36x256xf32> to vector<4x256xf32>
    %cst_17 = arith.constant 0.000000e+00 : f32
    %46 = vector.broadcast %cst_17 : f32 to vector<4x15xf32>
    %47 = vector.extract_strided_slice %45 {offsets = [0, 0], sizes = [4, 241], strides = [1, 1]} : vector<4x256xf32> to vector<4x241xf32>
    %48 = tpu.concatenate %46, %47 in 1 : vector<4x15xf32>, vector<4x241xf32> -> vector<4x256xf32>
    %cst_18 = arith.constant 0.000000e+00 : f32
    %49 = vector.shape_cast %29 : vector<1x256xi1> to vector<1x256xi1>
    %50 = vector.broadcast %49 : vector<1x256xi1> to vector<4x256xi1>
    %51 = vector.broadcast %cst_18 : f32 to vector<4x256xf32>
    %52 = arith.select %50, %48, %51 : vector<4x256xi1>, vector<4x256xf32>
    %53 = arith.addf %44, %52 : vector<4x256xf32>
    %54 = vector.extract_strided_slice %31 {offsets = [12, 0], sizes = [4, 256], strides = [1, 1]} : vector<36x256xf32> to vector<4x256xf32>
    %cst_19 = arith.constant 0.000000e+00 : f32
    %55 = vector.broadcast %cst_19 : f32 to vector<4x1xf32>
    %56 = vector.extract_strided_slice %54 {offsets = [0, 0], sizes = [4, 255], strides = [1, 1]} : vector<4x256xf32> to vector<4x255xf32>
    %57 = tpu.concatenate %55, %56 in 1 : vector<4x1xf32>, vector<4x255xf32> -> vector<4x256xf32>
    %cst_20 = arith.constant 0.000000e+00 : f32
    %58 = vector.shape_cast %27 : vector<1x256xi1> to vector<1x256xi1>
    %59 = vector.broadcast %58 : vector<1x256xi1> to vector<4x256xi1>
    %60 = vector.broadcast %cst_20 : f32 to vector<4x256xf32>
    %61 = arith.select %59, %57, %60 : vector<4x256xi1>, vector<4x256xf32>
    %62 = arith.addf %53, %61 : vector<4x256xf32>
    %63 = vector.extract_strided_slice %31 {offsets = [16, 0], sizes = [4, 256], strides = [1, 1]} : vector<36x256xf32> to vector<4x256xf32>
    %64 = arith.addf %62, %63 : vector<4x256xf32>
    %65 = vector.extract_strided_slice %31 {offsets = [20, 0], sizes = [4, 256], strides = [1, 1]} : vector<36x256xf32> to vector<4x256xf32>
    %66 = vector.extract_strided_slice %65 {offsets = [0, 1], sizes = [4, 255], strides = [1, 1]} : vector<4x256xf32> to vector<4x255xf32>
    %cst_21 = arith.constant 0.000000e+00 : f32
    %67 = vector.broadcast %cst_21 : f32 to vector<4x1xf32>
    %68 = tpu.concatenate %66, %67 in 1 : vector<4x255xf32>, vector<4x1xf32> -> vector<4x256xf32>
    %cst_22 = arith.constant 0.000000e+00 : f32
    %69 = vector.shape_cast %29 : vector<1x256xi1> to vector<1x256xi1>
    %70 = vector.broadcast %69 : vector<1x256xi1> to vector<4x256xi1>
    %71 = vector.broadcast %cst_22 : f32 to vector<4x256xf32>
    %72 = arith.select %70, %68, %71 : vector<4x256xi1>, vector<4x256xf32>
    %73 = arith.addf %64, %72 : vector<4x256xf32>
    %74 = vector.extract_strided_slice %31 {offsets = [24, 0], sizes = [4, 256], strides = [1, 1]} : vector<36x256xf32> to vector<4x256xf32>
    %75 = vector.extract_strided_slice %74 {offsets = [0, 15], sizes = [4, 241], strides = [1, 1]} : vector<4x256xf32> to vector<4x241xf32>
    %cst_23 = arith.constant 0.000000e+00 : f32
    %76 = vector.broadcast %cst_23 : f32 to vector<4x15xf32>
    %77 = tpu.concatenate %75, %76 in 1 : vector<4x241xf32>, vector<4x15xf32> -> vector<4x256xf32>
    %cst_24 = arith.constant 0.000000e+00 : f32
    %78 = vector.shape_cast %27 : vector<1x256xi1> to vector<1x256xi1>
    %79 = vector.broadcast %78 : vector<1x256xi1> to vector<4x256xi1>
    %80 = vector.broadcast %cst_24 : f32 to vector<4x256xf32>
    %81 = arith.select %79, %77, %80 : vector<4x256xi1>, vector<4x256xf32>
    %82 = arith.addf %73, %81 : vector<4x256xf32>
    %83 = vector.extract_strided_slice %31 {offsets = [28, 0], sizes = [4, 256], strides = [1, 1]} : vector<36x256xf32> to vector<4x256xf32>
    %84 = vector.extract_strided_slice %83 {offsets = [0, 16], sizes = [4, 240], strides = [1, 1]} : vector<4x256xf32> to vector<4x240xf32>
    %cst_25 = arith.constant 0.000000e+00 : f32
    %85 = vector.broadcast %cst_25 : f32 to vector<4x16xf32>
    %86 = tpu.concatenate %84, %85 in 1 : vector<4x240xf32>, vector<4x16xf32> -> vector<4x256xf32>
    %87 = arith.addf %82, %86 : vector<4x256xf32>
    %88 = vector.extract_strided_slice %31 {offsets = [32, 0], sizes = [4, 256], strides = [1, 1]} : vector<36x256xf32> to vector<4x256xf32>
    %89 = vector.extract_strided_slice %88 {offsets = [0, 17], sizes = [4, 239], strides = [1, 1]} : vector<4x256xf32> to vector<4x239xf32>
    %cst_26 = arith.constant 0.000000e+00 : f32
    %90 = vector.broadcast %cst_26 : f32 to vector<4x17xf32>
    %91 = tpu.concatenate %89, %90 in 1 : vector<4x239xf32>, vector<4x17xf32> -> vector<4x256xf32>
    %cst_27 = arith.constant 0.000000e+00 : f32
    %92 = vector.shape_cast %29 : vector<1x256xi1> to vector<1x256xi1>
    %93 = vector.broadcast %92 : vector<1x256xi1> to vector<4x256xi1>
    %94 = vector.broadcast %cst_27 : f32 to vector<4x256xf32>
    %95 = arith.select %93, %91, %94 : vector<4x256xi1>, vector<4x256xf32>
    %96 = arith.addf %87, %95 : vector<4x256xf32>
    %c0_28 = arith.constant 0 : index
    %97 = memref.load %arg6[%c0_28] : memref<2xf32, #tpu.memory_space<smem>>
    %98 = vector.broadcast %97 : f32 to vector<4x256xf32>
    %99 = arith.addf %96, %98 : vector<4x256xf32>
    %cst_29 = arith.constant 0.000000e+00 : f32
    %100 = vector.broadcast %cst_29 : f32 to vector<4x256xf32>
    %101 = arith.maximumf %99, %100 : vector<4x256xf32>
    %cst_30 = arith.constant 0.000000e+00 : f32
    %102 = vector.broadcast %cst_30 : f32 to vector<4x17xf32>
    %103 = vector.extract_strided_slice %101 {offsets = [0, 0], sizes = [4, 239], strides = [1, 1]} : vector<4x256xf32> to vector<4x239xf32>
    %104 = tpu.concatenate %102, %103 in 1 : vector<4x17xf32>, vector<4x239xf32> -> vector<4x256xf32>
    %cst_31 = arith.constant 0.000000e+00 : f32
    %105 = vector.shape_cast %27 : vector<1x256xi1> to vector<1x256xi1>
    %106 = vector.broadcast %105 : vector<1x256xi1> to vector<4x256xi1>
    %107 = vector.broadcast %cst_31 : f32 to vector<4x256xf32>
    %108 = arith.select %106, %104, %107 : vector<4x256xi1>, vector<4x256xf32>
    %cst_32 = arith.constant 0.000000e+00 : f32
    %109 = vector.broadcast %cst_32 : f32 to vector<4x16xf32>
    %110 = vector.extract_strided_slice %101 {offsets = [0, 0], sizes = [4, 240], strides = [1, 1]} : vector<4x256xf32> to vector<4x240xf32>
    %111 = tpu.concatenate %109, %110 in 1 : vector<4x16xf32>, vector<4x240xf32> -> vector<4x256xf32>
    %cst_33 = arith.constant 0.000000e+00 : f32
    %112 = vector.broadcast %cst_33 : f32 to vector<4x15xf32>
    %113 = vector.extract_strided_slice %101 {offsets = [0, 0], sizes = [4, 241], strides = [1, 1]} : vector<4x256xf32> to vector<4x241xf32>
    %114 = tpu.concatenate %112, %113 in 1 : vector<4x15xf32>, vector<4x241xf32> -> vector<4x256xf32>
    %cst_34 = arith.constant 0.000000e+00 : f32
    %115 = vector.shape_cast %29 : vector<1x256xi1> to vector<1x256xi1>
    %116 = vector.broadcast %115 : vector<1x256xi1> to vector<4x256xi1>
    %117 = vector.broadcast %cst_34 : f32 to vector<4x256xf32>
    %118 = arith.select %116, %114, %117 : vector<4x256xi1>, vector<4x256xf32>
    %cst_35 = arith.constant 0.000000e+00 : f32
    %119 = vector.broadcast %cst_35 : f32 to vector<4x1xf32>
    %120 = vector.extract_strided_slice %101 {offsets = [0, 0], sizes = [4, 255], strides = [1, 1]} : vector<4x256xf32> to vector<4x255xf32>
    %121 = tpu.concatenate %119, %120 in 1 : vector<4x1xf32>, vector<4x255xf32> -> vector<4x256xf32>
    %cst_36 = arith.constant 0.000000e+00 : f32
    %122 = vector.shape_cast %27 : vector<1x256xi1> to vector<1x256xi1>
    %123 = vector.broadcast %122 : vector<1x256xi1> to vector<4x256xi1>
    %124 = vector.broadcast %cst_36 : f32 to vector<4x256xf32>
    %125 = arith.select %123, %121, %124 : vector<4x256xi1>, vector<4x256xf32>
    %126 = vector.extract_strided_slice %101 {offsets = [0, 1], sizes = [4, 255], strides = [1, 1]} : vector<4x256xf32> to vector<4x255xf32>
    %cst_37 = arith.constant 0.000000e+00 : f32
    %127 = vector.broadcast %cst_37 : f32 to vector<4x1xf32>
    %128 = tpu.concatenate %126, %127 in 1 : vector<4x255xf32>, vector<4x1xf32> -> vector<4x256xf32>
    %cst_38 = arith.constant 0.000000e+00 : f32
    %129 = vector.shape_cast %29 : vector<1x256xi1> to vector<1x256xi1>
    %130 = vector.broadcast %129 : vector<1x256xi1> to vector<4x256xi1>
    %131 = vector.broadcast %cst_38 : f32 to vector<4x256xf32>
    %132 = arith.select %130, %128, %131 : vector<4x256xi1>, vector<4x256xf32>
    %133 = vector.extract_strided_slice %101 {offsets = [0, 15], sizes = [4, 241], strides = [1, 1]} : vector<4x256xf32> to vector<4x241xf32>
    %cst_39 = arith.constant 0.000000e+00 : f32
    %134 = vector.broadcast %cst_39 : f32 to vector<4x15xf32>
    %135 = tpu.concatenate %133, %134 in 1 : vector<4x241xf32>, vector<4x15xf32> -> vector<4x256xf32>
    %cst_40 = arith.constant 0.000000e+00 : f32
    %136 = vector.shape_cast %27 : vector<1x256xi1> to vector<1x256xi1>
    %137 = vector.broadcast %136 : vector<1x256xi1> to vector<4x256xi1>
    %138 = vector.broadcast %cst_40 : f32 to vector<4x256xf32>
    %139 = arith.select %137, %135, %138 : vector<4x256xi1>, vector<4x256xf32>
    %140 = vector.extract_strided_slice %101 {offsets = [0, 16], sizes = [4, 240], strides = [1, 1]} : vector<4x256xf32> to vector<4x240xf32>
    %cst_41 = arith.constant 0.000000e+00 : f32
    %141 = vector.broadcast %cst_41 : f32 to vector<4x16xf32>
    %142 = tpu.concatenate %140, %141 in 1 : vector<4x240xf32>, vector<4x16xf32> -> vector<4x256xf32>
    %143 = vector.extract_strided_slice %101 {offsets = [0, 17], sizes = [4, 239], strides = [1, 1]} : vector<4x256xf32> to vector<4x239xf32>
    %cst_42 = arith.constant 0.000000e+00 : f32
    %144 = vector.broadcast %cst_42 : f32 to vector<4x17xf32>
    %145 = tpu.concatenate %143, %144 in 1 : vector<4x239xf32>, vector<4x17xf32> -> vector<4x256xf32>
    %cst_43 = arith.constant 0.000000e+00 : f32
    %146 = vector.shape_cast %29 : vector<1x256xi1> to vector<1x256xi1>
    %147 = vector.broadcast %146 : vector<1x256xi1> to vector<4x256xi1>
    %148 = vector.broadcast %cst_43 : f32 to vector<4x256xf32>
    %149 = arith.select %147, %145, %148 : vector<4x256xi1>, vector<4x256xf32>
    %150 = tpu.concatenate %108, %111, %118, %125, %101, %132, %139, %142, %149 in 0 : vector<4x256xf32>, vector<4x256xf32>, vector<4x256xf32>, vector<4x256xf32>, vector<4x256xf32>, vector<4x256xf32>, vector<4x256xf32>, vector<4x256xf32>, vector<4x256xf32> -> vector<36x256xf32>
    %c0_44 = arith.constant 0 : index
    %c0_45 = arith.constant 0 : index
    %151 = vector.load %arg5[%c0_44, %c0_45] : memref<16x36xf32, #tpu.memory_space<vmem>>, vector<16x36xf32>
    %cst_46 = arith.constant dense<0.000000e+00> : vector<16x256xf32>
    %152 = tpu.matmul %151, %150, %cst_46 {dimension_numbers = #tpu.dot_dimension_numbers<[1], [0], [0], [1], [0, 0, 1, 1], [], []>} : vector<16x36xf32>, vector<36x256xf32>, vector<16x256xf32> -> vector<16x256xf32>
    %c1 = arith.constant 1 : index
    %153 = memref.load %arg6[%c1] : memref<2xf32, #tpu.memory_space<smem>>
    %154 = vector.broadcast %153 : f32 to vector<16x256xf32>
    %155 = arith.addf %152, %154 : vector<16x256xf32>
    %c0_47 = arith.constant 0 : index
    %c0_48 = arith.constant 0 : index
    %c0_49 = arith.constant 0 : index
    %156 = vector.load %arg7[%c0_47, %c0_48, %c0_49] : memref<1x16x256xf32, #tpu.memory_space<vmem>>, vector<1x16x256xf32>
    %157 = vector.shape_cast %156 : vector<1x16x256xf32> to vector<16x256xf32>
    %158 = vector.shape_cast %155 : vector<16x256xf32> to vector<1x16x256xf32>
    tpu.vector_store %arg7[%c0_47, %c0_48, %c0_49], %158 {strides = array<i32>} : memref<1x16x256xf32, #tpu.memory_space<vmem>>, vector<1x16x256xf32>,
    return
  }
  func.func @transform_0(%arg0: i32) -> (i32, i32, i32) {
    %c0_i32 = arith.constant 0 : i32
    %c0_i32_0 = arith.constant 0 : i32
    %c0_i32_1 = arith.constant 0 : i32
    return %arg0, %c0_i32, %c0_i32_0 : i32, i32, i32
  }
  func.func @transform_1(%arg0: i32) -> (i32, i32) {
    %c0_i32 = arith.constant 0 : i32
    %c0_i32_0 = arith.constant 0 : i32
    %c0_i32_1 = arith.constant 0 : i32
    return %c0_i32, %c0_i32_0 : i32, i32
  }
  func.func @transform_2(%arg0: i32) -> (i32, i32) {
    %c0_i32 = arith.constant 0 : i32
    %c0_i32_0 = arith.constant 0 : i32
    %c0_i32_1 = arith.constant 0 : i32
    return %c0_i32, %c0_i32_0 : i32, i32
  }
  func.func @transform_3(%arg0: i32) -> (i32, i32) {
    %c0_i32 = arith.constant 0 : i32
    %c0_i32_0 = arith.constant 0 : i32
    %c0_i32_1 = arith.constant 0 : i32
    return %c0_i32, %c0_i32_0 : i32, i32
  }
  func.func @transform_4(%arg0: i32) -> (i32, i32) {
    %c0_i32 = arith.constant 0 : i32
    %c0_i32_0 = arith.constant 0 : i32
    %c0_i32_1 = arith.constant 0 : i32
    return %c0_i32, %c0_i32_0 : i32, i32
  }
  func.func @transform_5(%arg0: i32) -> i32 {
    %c0_i32 = arith.constant 0 : i32
    %c0_i32_0 = arith.constant 0 : i32
    return %c0_i32 : i32
  }
  func.func @transform_6(%arg0: i32) -> (i32, i32, i32) {
    %c0_i32 = arith.constant 0 : i32
    %c0_i32_0 = arith.constant 0 : i32
    %c0_i32_1 = arith.constant 0 : i32
    return %arg0, %c0_i32, %c0_i32_0 : i32, i32, i32
  }
}

</mosaic_0001>

<llo_original>
// kernel: upconv_block_forward.1
$region0: #{upconv_block_forward.1}
  #allocation0 [shape = 'u32[]', space=smem, size = 0x4, offset = 0x4, fixed_abs, tag = 'smem constant byte address 0x4 - core index']
  #allocation1 [shape = 'u32[144,128]{1,0:T(1,128)}', space=vmem, size = 0x12000, scoped, tag = 'internal scratch']
  %s0 = inlined_call_operand.vmem [shape: f32[2,4,256], index: 0, kind: input, shape index: {}]
  %s1 = inlined_call_operand.vmem [shape: f32[16,4], index: 1, kind: input, shape index: {}]
  %s2 = inlined_call_operand.vmem [shape: f32[16,1], index: 2, kind: input, shape index: {}]
  %s3 = inlined_call_operand.vmem [shape: f32[36,16], index: 3, kind: input, shape index: {}]
  %s4 = inlined_call_operand.hbm [shape: f32[16,36], index: 4, kind: input, shape index: {}]
  %s5 = inlined_call_operand.hbm [shape: f32[2], index: 5, kind: input, shape index: {}]
  %s6 = inlined_call_operand.vmem [shape: f32[2,16,256], index: 6, kind: output, shape index: {}]
  %s7 = sld [smem:[#allocation0]]
  $region65: #{upconv_block_forward.1} parent=0
    _
  %s9 = ssub.s32 1, %s7
  %s10 = scalar_select 0, %s9, %s7
  $region1: #{upconv_block_forward.1} parent=0
    #allocation2 [shape = 'u8[8192]{0}', space=vmem, size = 0x2000, scoped, tag = 'input window, operand 4, single buffered']
    #allocation3 [shape = 's32[2]{0}', space=sflag, size = 0x8, scoped, tag = 'scoped memory for upconv_block_forward.1']
    #allocation4 [shape = 's32[2]{0}', space=sflag, size = 0x8, scoped, tag = 'scoped memory for upconv_block_forward.1']
    #allocation5 [shape = 'u8[512]{0}', space=smem, size = 0x200, scoped, tag = 'input window, operand 5, single buffered']
    %11 = vsyncpa [#allocation3], 0
    %12 = vsyncpa [#allocation4], 0
    loop: start=0, step=1, limit=4
    $region2: #{upconv_block_forward.1} parent=1 // loop_pre_header
      _
    $region3: #{upconv_block_forward.1} parent=1 // loop_header
      %s14 = sphi 0, %s18
      %p15 = scmp.ge.s32.totalorder %s14, 4
      %s24 = sphi 0, %s26
      %s27 = sphi 0, %s24
      %s28 = sphi 0, %s27
      %s44 = sphi 0, %s28
      %s48 = sphi 0, %s48
      %s50 = sphi 0, %s48
      %s51 = sphi 0, %s50
      %s65 = sphi 0, %s51
      %s69 = sphi 0, %s69
      %s71 = sphi 0, %s69
      %s72 = sphi 0, %s71
      %s86 = sphi 0, %s72
      %s90 = sphi 0, %s90
      %s92 = sphi 0, %s90
      %s93 = sphi 0, %s92
      %s107 = sphi 0, %s93
      %s111 = sphi 0, %s111
      %s113 = sphi 0, %s111
      %s114 = sphi 0, %s113
      %s128 = sphi 0, %s114
      %s132 = sphi 0, %s132
      %s134 = sphi 0, %s132
      %s135 = sphi 0, %s134
      %s149 = sphi 0, %s135
      %s155 = sphi 0, %s157
      %s158 = sphi 0, %s155
      %s159 = sphi 0, %s158
      %s175 = sphi 0, %s159
    $region4: #{upconv_block_forward.1} parent=1 // loop_header_branch
      %17 = sbr.rel (%p15) target = $region8
    $region5: #{upconv_block_forward.1} parent=1 // loop_body
      %s19 = ssub.s32 %s14, 1
      %s20 = ssub.s32 %s14, 2
      %s21 = sadd.s32 %s14, 1
      %s22 = ssub.s32 %s14, %s21
      %p23 = scmp.eq.s32.totalorder %s22, 0
      %s25 = sadd.s32 %s24, 1
      %s26 = scalar_select %p23, %s24, %s25
      %p29 = pneg %p23
      %p30 = scmp.eq.s32.totalorder %s14, 1
      %p31 = por %p29, %p30
      %p32 = scmp.ne.s32.totalorder %s24, %s27
      %p33 = scmp.eq.s32.totalorder %s14, 0
      %p34 = por %p32, %p33
      %p35 = scmp.ne.s32.totalorder %s24, %s27
      %p36 = scmp.eq.s32.totalorder %s19, 1
      %p37 = por %p35, %p36
      %p38 = scmp.ne.s32.totalorder %s27, %s28
      %p39 = scmp.eq.s32.totalorder %s19, 0
      %p40 = por %p38, %p39
      %p41 = scmp.ne.s32.totalorder %s27, %s28
      %p42 = scmp.eq.s32.totalorder %s20, 1
      %p43 = por %p41, %p42
      %p45 = scmp.ne.s32.totalorder %s28, %s44
      %p46 = scmp.eq.s32.totalorder %s20, 0
      %p47 = por %p45, %p46
      %s49 = sadd.s32 %s48, 1
      %p52 = scmp.eq.s32.totalorder %s14, 1
      %p53 = scmp.ne.s32.totalorder %s48, %s50
      %p54 = scmp.eq.s32.totalorder %s14, 0
      %p55 = por %p53, %p54
      %p56 = scmp.ne.s32.totalorder %s48, %s50
      %p57 = scmp.eq.s32.totalorder %s19, 1
      %p58 = por %p56, %p57
      %p59 = scmp.ne.s32.totalorder %s50, %s51
      %p60 = scmp.eq.s32.totalorder %s19, 0
      %p61 = por %p59, %p60
      %p62 = scmp.ne.s32.totalorder %s50, %s51
      %p63 = scmp.eq.s32.totalorder %s20, 1
      %p64 = por %p62, %p63
      %p66 = scmp.ne.s32.totalorder %s51, %s65
      %p67 = scmp.eq.s32.totalorder %s20, 0
      %p68 = por %p66, %p67
      %s70 = sadd.s32 %s69, 1
      %p73 = scmp.eq.s32.totalorder %s14, 1
      %p74 = scmp.ne.s32.totalorder %s69, %s71
      %p75 = scmp.eq.s32.totalorder %s14, 0
      %p76 = por %p74, %p75
      %p77 = scmp.ne.s32.totalorder %s69, %s71
      %p78 = scmp.eq.s32.totalorder %s19, 1
      %p79 = por %p77, %p78
      %p80 = scmp.ne.s32.totalorder %s71, %s72
      %p81 = scmp.eq.s32.totalorder %s19, 0
      %p82 = por %p80, %p81
      %p83 = scmp.ne.s32.totalorder %s71, %s72
      %p84 = scmp.eq.s32.totalorder %s20, 1
      %p85 = por %p83, %p84
      %p87 = scmp.ne.s32.totalorder %s72, %s86
      %p88 = scmp.eq.s32.totalorder %s20, 0
      %p89 = por %p87, %p88
      %s91 = sadd.s32 %s90, 1
      %p94 = scmp.eq.s32.totalorder %s14, 1
      %p95 = scmp.ne.s32.totalorder %s90, %s92
      %p96 = scmp.eq.s32.totalorder %s14, 0
      %p97 = por %p95, %p96
      %p98 = scmp.ne.s32.totalorder %s90, %s92
      %p99 = scmp.eq.s32.totalorder %s19, 1
      %p100 = por %p98, %p99
      %p101 = scmp.ne.s32.totalorder %s92, %s93
      %p102 = scmp.eq.s32.totalorder %s19, 0
      %p103 = por %p101, %p102
      %p104 = scmp.ne.s32.totalorder %s92, %s93
      %p105 = scmp.eq.s32.totalorder %s20, 1
      %p106 = por %p104, %p105
      %p108 = scmp.ne.s32.totalorder %s93, %s107
      %p109 = scmp.eq.s32.totalorder %s20, 0
      %p110 = por %p108, %p109
      %s112 = sadd.s32 %s111, 1
      %p115 = scmp.eq.s32.totalorder %s14, 1
      %p116 = scmp.ne.s32.totalorder %s111, %s113
      %p117 = scmp.eq.s32.totalorder %s14, 0
      %p118 = por %p116, %p117
      %p119 = scmp.ne.s32.totalorder %s111, %s113
      %p120 = scmp.eq.s32.totalorder %s19, 1
      %p121 = por %p119, %p120
      %p122 = scmp.ne.s32.totalorder %s113, %s114
      %p123 = scmp.eq.s32.totalorder %s19, 0
      %p124 = por %p122, %p123
      %p125 = scmp.ne.s32.totalorder %s113, %s114
      %p126 = scmp.eq.s32.totalorder %s20, 1
      %p127 = por %p125, %p126
      %p129 = scmp.ne.s32.totalorder %s114, %s128
      %p130 = scmp.eq.s32.totalorder %s20, 0
      %p131 = por %p129, %p130
      %s133 = sadd.s32 %s132, 1
      %p136 = scmp.eq.s32.totalorder %s14, 1
      %p137 = scmp.ne.s32.totalorder %s132, %s134
      %p138 = scmp.eq.s32.totalorder %s14, 0
      %p139 = por %p137, %p138
      %p140 = scmp.ne.s32.totalorder %s132, %s134
      %p141 = scmp.eq.s32.totalorder %s19, 1
      %p142 = por %p140, %p141
      %p143 = scmp.ne.s32.totalorder %s134, %s135
      %p144 = scmp.eq.s32.totalorder %s19, 0
      %p145 = por %p143, %p144
      %p146 = scmp.ne.s32.totalorder %s134, %s135
      %p147 = scmp.eq.s32.totalorder %s20, 1
      %p148 = por %p146, %p147
      %p150 = scmp.ne.s32.totalorder %s135, %s149
      %p151 = scmp.eq.s32.totalorder %s20, 0
      %p152 = por %p150, %p151
      %s153 = ssub.s32 %s14, %s21
      %p154 = scmp.eq.s32.totalorder %s153, 0
      %s156 = sadd.s32 %s155, 1
      %s157 = scalar_select %p154, %s155, %s156
      %p160 = pneg %p154
      %p161 = scmp.eq.s32.totalorder %s14, 1
      %p162 = por %p160, %p161
      %p163 = scmp.ne.s32.totalorder %s155, %s158
      %p164 = scmp.eq.s32.totalorder %s14, 0
      %p165 = por %p163, %p164
      %p166 = scmp.ne.s32.totalorder %s155, %s158
      %p167 = scmp.eq.s32.totalorder %s19, 1
      %p168 = por %p166, %p167
      %p169 = scmp.ne.s32.totalorder %s158, %s159
      %p170 = scmp.eq.s32.totalorder %s19, 0
      %p171 = por %p169, %p170
      %p172 = scmp.ne.s32.totalorder %s158, %s159
      %p173 = scmp.eq.s32.totalorder %s20, 1
      %p174 = por %p172, %p173
      %p176 = scmp.ne.s32.totalorder %s159, %s175
      %p177 = scmp.eq.s32.totalorder %s20, 0
      %p178 = por %p176, %p177
      %p179 = scmp.le.s32.totalorder 1, %s14
      %p180 = scmp.lt.s32.totalorder %s14, 3
      %p181 = pnand %p179, %p180
      %p182 = pneg %p181
      // Predicated region
      $region9: #{upconv_block_forward.1} parent=5 // pred_check
        _
      $region10: #{upconv_block_forward.1} parent=5 // pred_check_branch
        %184 = sbr.rel (%p181) target = $region12
      $region11: #{upconv_block_forward.1} parent=5 // pred_region
        %s185 = ssub.s32 %s14, 1
        // Predicated region
        $region13: #{upconv_block_forward.1} parent=11 // pred_check
          %p186 = pneg %p61
        $region14: #{upconv_block_forward.1} parent=11 // pred_check_branch
          %188 = sbr.rel (%p186) target = $region16
        $region15: #{upconv_block_forward.1} parent=11 // pred_region
          _
        $region16: #{upconv_block_forward.1} parent=11 // pred_fallthru
          _
        // Predicated region
        $region17: #{upconv_block_forward.1} parent=11 // pred_check
          %p189 = pneg %p82
        $region18: #{upconv_block_forward.1} parent=11 // pred_check_branch
          %191 = sbr.rel (%p189) target = $region20
        $region19: #{upconv_block_forward.1} parent=11 // pred_region
          _
        $region20: #{upconv_block_forward.1} parent=11 // pred_fallthru
          _
        // Predicated region
        $region21: #{upconv_block_forward.1} parent=11 // pred_check
          %p192 = pneg %p103
        $region22: #{upconv_block_forward.1} parent=11 // pred_check_branch
          %194 = sbr.rel (%p192) target = $region24
        $region23: #{upconv_block_forward.1} parent=11 // pred_region
          _
        $region24: #{upconv_block_forward.1} parent=11 // pred_fallthru
          _
        // Predicated region
        $region25: #{upconv_block_forward.1} parent=11 // pred_check
          %p195 = pneg %p124
        $region26: #{upconv_block_forward.1} parent=11 // pred_check_branch
          %197 = sbr.rel (%p195) target = $region28
        $region27: #{upconv_block_forward.1} parent=11 // pred_region
          %s199 = ssub.s32 256, 256
          %200 = vsyncadd [#allocation3], %s199
          %s201 = sshll.u32 [#allocation2], 4
          %s202 = int_to_ptr.vmem [resolvable:$true] %s201
          %207 = dma.hbm_to_vmem [thread:$0]  %s4, 256, %s202, [#allocation3], 128, 128, 8
        $region28: #{upconv_block_forward.1} parent=11 // pred_fallthru
          _
        // Predicated region
        $region29: #{upconv_block_forward.1} parent=11 // pred_check
          %p208 = pneg %p145
        $region30: #{upconv_block_forward.1} parent=11 // pred_check_branch
          %210 = sbr.rel (%p208) target = $region32
        $region31: #{upconv_block_forward.1} parent=11 // pred_region
          %s212 = ssub.s32 16, 16
          %213 = vsyncadd [#allocation4], %s212
          %216 = dma.hbm_to_smem %s5, 16, [#allocation5], [#allocation4]
        $region32: #{upconv_block_forward.1} parent=11 // pred_fallthru
          _
      $region12: #{upconv_block_forward.1} parent=5 // pred_fallthru
        _
      %p217 = scmp.lt.s32.totalorder %s14, 2
      // Predicated region
      $region33: #{upconv_block_forward.1} parent=5 // pred_check
        %p218 = pneg %p217
      $region34: #{upconv_block_forward.1} parent=5 // pred_check_branch
        %220 = sbr.rel (%p218) target = $region36
      $region35: #{upconv_block_forward.1} parent=5 // pred_region
        // Predicated region
        $region37: #{upconv_block_forward.1} parent=35 // pred_check
          %p221 = pneg %p34
        $region38: #{upconv_block_forward.1} parent=35 // pred_check_branch
          %223 = sbr.rel (%p221) target = $region40
        $region39: #{upconv_block_forward.1} parent=35 // pred_region
          %p224 = scmp.lt.s32.totalorder %s14, 1
          %s225 = scalar_select %p224, %s14, 1
          %s226 = smul.addr %s225, 2
          %s227 = smul.addr %s226, 4
          %s228 = scalar_lea.vmem %s0, %s227
        $region40: #{upconv_block_forward.1} parent=35 // pred_fallthru
          _
      $region36: #{upconv_block_forward.1} parent=5 // pred_fallthru
        _
      %p229 = scmp.le.s32.totalorder 1, %s14
      %p230 = scmp.lt.s32.totalorder %s14, 3
      %p231 = pnand %p229, %p230
      %p232 = pneg %p231
      // Predicated region
      $region41: #{upconv_block_forward.1} parent=5 // pred_check
        _
      $region42: #{upconv_block_forward.1} parent=5 // pred_check_branch
        %234 = sbr.rel (%p231) target = $region44
      $region43: #{upconv_block_forward.1} parent=5 // pred_region
        %s235 = ssub.s32 %s14, 1
        // Predicated region
        $region45: #{upconv_block_forward.1} parent=43 // pred_check
          %p236 = pneg %p124
        $region46: #{upconv_block_forward.1} parent=43 // pred_check_branch
          %238 = sbr.rel (%p236) target = $region48
        $region47: #{upconv_block_forward.1} parent=43 // pred_region
          %239 = dma.done [#allocation3], 256
        $region48: #{upconv_block_forward.1} parent=43 // pred_fallthru
          _
        // Predicated region
        $region49: #{upconv_block_forward.1} parent=43 // pred_check
          %p240 = pneg %p145
        $region50: #{upconv_block_forward.1} parent=43 // pred_check_branch
          %242 = sbr.rel (%p240) target = $region52
        $region51: #{upconv_block_forward.1} parent=43 // pred_region
          %243 = dma.done [#allocation4], 16
        $region52: #{upconv_block_forward.1} parent=43 // pred_fallthru
          _
        %244 = sfence
        %p245 = scmp.lt.s32.totalorder %s19, 1
        %s246 = scalar_select %p245, %s19, 1
        %s247 = smul.addr %s246, 2
        %s248 = smul.addr %s247, 4
        %s249 = scalar_lea.vmem %s0, %s248
        %p250 = pneg %p40
        %p251 = pneg %p37
        %p252 = pneg %p61
        %p253 = pneg %p58
        %p254 = pneg %p82
        %p255 = pneg %p79
        %p256 = pneg %p103
        %p257 = pneg %p100
        %p258 = pneg %p124
        %p259 = pneg %p121
        %p260 = pneg %p145
        %p261 = pneg %p142
        %p262 = pneg %p171
        %p263 = pneg %p168
        %p264 = scmp.lt.s32.totalorder %s19, 1
        %s265 = scalar_select %p264, %s19, 1
        %s266 = smul.addr %s265, 4
        %s267 = smul.addr %s266, 8
        %s268 = scalar_lea.vmem %s6, %s267
        %p269 = scmp.lt.s32.totalorder %s19, 1
        %s270 = scalar_select %p269, %s19, 1
        %s271 = smul.addr %s270, 2
        %s272 = smul.addr %s271, 4
        %s273 = scalar_lea.vmem %s0, %s272
        %p274 = scmp.lt.s32.totalorder %s19, 1
        %s275 = scalar_select %p274, %s19, 1
        %s276 = smul.addr %s275, 4
        %s277 = smul.addr %s276, 8
        %s278 = scalar_lea.vmem %s6, %s277
        %v279 = vld [vmem:[%s1] sm:$0xff]
        %v280 = vld [vmem:[%s1 + $0x8] sm:$0xff]
        %v281 = vld [vmem:[%s273] sm:$0xff]
        %v282 = vld [vmem:[%s2] sm:$0xff]
        %v283 = vld [vmem:[%s2 + $0x8] sm:$0xff]
        %285 = vset.pattern.permute.xlu0 0
        %286 = vperm.xlu0 %285, %v282
        %v287 = vpop.permute.xlu0 %286
        %290 = vset.pattern.permute.xlu0 0
        %291 = vperm.xlu0 %290, %v283
        %v292 = vpop.permute.xlu0 %291
        %v295 = vcombine.high %v281, %v281
        %vm296 = vcmask 31744
        %v298 = vsel %vm296, %v279, 0
        %v301 = vsel %vm296, %v280, 0
        %vm303 = vcmask 1043456
        %v304 = vsel %vm303, %v281, 0
        %v306 = vsel %vm303, %v295, 0
        %308 = vmatprep.subr.mxu0 %v306
        %309 = vmatpush1.msra.mxu0 %v304
        %310 = vmatprep.subr.mxu0 0.0
        %311 = vmatpush1.msra.mxu0 0.0
        %312 = vmatprep.subr.mxu0 0.0
        %313 = vmatpush1.msra.mxu0 0.0
        %314 = vmatprep.subr.mxu0 0.0
        %315 = vmatpush1.msra.mxu0 0.0
        %316 = vmatprep.subr.mxu0 0.0
        %317 = vmatpush1.msra.mxu0 0.0
        %318 = vmatprep.subr.mxu0 0.0
        %319 = vmatpush1.msra.mxu0 0.0
        %320 = vmatprep.subr.mxu0 0.0
        %321 = vmatpush1.msra.mxu0 0.0
        %322 = vmatprep.subr.mxu0 0.0
        %323 = vmatpush1.msra.mxu0 0.0
        %324 = vmatprep.subr.mxu0 0.0
        %325 = vmatpush1.msra.mxu0 0.0
        %326 = vmatprep.subr.mxu0 0.0
        %327 = vmatpush1.msra.mxu0 0.0
        %328 = vmatprep.subr.mxu0 0.0
        %329 = vmatpush1.msra.mxu0 0.0
        %330 = vmatprep.subr.mxu0 0.0
        %331 = vmatpush1.msra.mxu0 0.0
        %332 = vmatprep.subr.mxu0 0.0
        %333 = vmatpush1.msra.mxu0 0.0
        %334 = vmatprep.subr.mxu0 0.0
        %335 = vmatpush1.msra.mxu0 0.0
        %336 = vmatprep.subr.mxu0 0.0
        %337 = vmatpush1.msra.mxu0 0.0
        %338 = vmatprep.subr.mxu0 0.0
        %339 = vmatpush1.msra.mxu0 0.0
        %340 = vmatprep.subr.mxu0 0.0
        %341 = vmatpush1.msra.mxu0 0.0
        %342 = vmatprep.subr.mxu0 0.0
        %343 = vmatpush1.msra.mxu0 0.0
        %344 = vmatprep.subr.mxu0 0.0
        %345 = vmatpush1.msra.mxu0 0.0
        %346 = vmatprep.subr.mxu0 0.0
        %347 = vmatpush1.msra.mxu0 0.0
        %348 = vmatprep.subr.mxu0 0.0
        %349 = vmatpush1.msra.mxu0 0.0
        %350 = vmatprep.subr.mxu0 0.0
        %351 = vmatpush1.msra.mxu0 0.0
        %352 = vmatprep.subr.mxu0 0.0
        %353 = vmatpush1.msra.mxu0 0.0
        %354 = vmatprep.subr.mxu0 0.0
        %355 = vmatpush1.msra.mxu0 0.0
        %356 = vmatprep.subr.mxu0 0.0
        %357 = vmatpush1.msra.mxu0 0.0
        %358 = vmatprep.subr.mxu0 0.0
        %359 = vmatpush1.msra.mxu0 0.0
        %360 = vmatprep.subr.mxu0 0.0
        %361 = vmatpush1.msra.mxu0 0.0
        %362 = vmatprep.subr.mxu0 0.0
        %363 = vmatpush1.msra.mxu0 0.0
        %364 = vmatprep.subr.mxu0 0.0
        %365 = vmatpush1.msra.mxu0 0.0
        %366 = vmatprep.subr.mxu0 0.0
        %367 = vmatpush1.msra.mxu0 0.0
        %368 = vmatprep.subr.mxu0 0.0
        %369 = vmatpush1.msra.mxu0 0.0
        %370 = vmatprep.subr.mxu0 0.0
        %371 = vmatpush1.msra.mxu0 0.0
        %372 = vmatprep.mubr.f32.mxu0 0.0
        %373 = vmatmul.mubr.f32.gmra.mrb[0].mxu0 %v298
        %v374 = vpop.f32.mrb[0].mxu0
        %v375 = vadd.f32 %v287, %v374
        %v376 = vpop.f32.mrb[0].mxu0
        %v377 = vadd.f32 %v287, %v376
        %378 = vmatprep.mubr.f32.mxu0 0.0
        %379 = vmatmul.mubr.f32.gmra.mrb[0].mxu0 %v301
        %v380 = vpop.f32.mrb[0].mxu0
        %v381 = vadd.f32 %v292, %v380
        %v382 = vpop.f32.mrb[0].mxu0
        %v383 = vadd.f32 %v292, %v382
        %384 = vdwg.mxu0
        %v385 = vmax.f32 %v375, 0.0
        %v386 = vmax.f32 %v377, 0.0
        %v387 = vmax.f32 %v381, 0.0
        %v388 = vmax.f32 %v383, 0.0
        %v389 = vlaneseq
        %v390 = vand.u32 %v389, 127
        %v391 = vadd.s32 %v390, 128
        %vm392 = vcmp.lt.s32.totalorder %v390, 0
        %v393 = vsub.s32 0, %v390
        %v394 = vsel %vm392, %v393, %v390
        %v395 = vshrl.u32 %v394, 4
        %v396 = vand.u32 %v394, 15
        %v397 = vsub.s32 0, %v396
        %v398 = vsel %vm392, %v397, %v396
        %vm399 = vcmp.lt.s32.totalorder %v391, 0
        %v400 = vsub.s32 0, %v391
        %v401 = vsel %vm399, %v400, %v391
        %v402 = vshrl.u32 %v401, 4
        %v403 = vand.u32 %v401, 15
        %v404 = vsub.s32 0, %v403
        %v405 = vsel %vm399, %v404, %v403
        %vm406 = vcmp.ne.s32.totalorder %v398, 0
        %vm407 = vcmp.ne.s32.totalorder %v405, 0
        %vm408 = vcmp.lt.s32.totalorder %v398, 0
        %vm409 = vcmp.lt.s32.totalorder %v405, 0
        %vm410 = vmand %vm408, %vm406
        %vm411 = vmand %vm409, %vm407
        %v412 = vadd.s32 %v398, 16
        %v413 = vadd.s32 %v405, 16
        %v414 = vsel %vm410, %v412, %v398
        %v415 = vsel %vm411, %v413, %v405
        %vm416 = vcmp.ge.s32.totalorder %v414, 1
        %vm417 = vcmp.ge.s32.totalorder %v415, 1
        %vm418 = vcmp.le.s32.totalorder %v414, 14
        %vm419 = vcmp.le.s32.totalorder %v415, 14
        %v420 = vld [vmem:[%s3] sm:$0xff]
        %v421 = vld [vmem:[%s3 + $0x8] sm:$0xff]
        %v422 = vld [vmem:[%s3 + $0x10] sm:$0xff]
        %v423 = vld [vmem:[%s3 + $0x18] sm:$0xff]
        %v424 = vld [vmem:[%s3 + $0x20] sm:$0xf]
        %vm425 = vcmask 130048
        %v427 = vsel %vm425, %v420, 0
        %v430 = vsel %vm425, %v421, 0
        %v433 = vsel %vm425, %v422, 0
        %v436 = vsel %vm425, %v423, 0
        %v439 = vsel %vm425, %v424, 0
        %441 = vmatprep.subr.mxu0 %v386
        %442 = vmatpush1.msra.mxu0 %v385
        %443 = vmatprep.subr.mxu0 %v388
        %444 = vmatpush1.msra.mxu0 %v387
        %445 = vmatprep.subr.mxu0 0.0
        %446 = vmatpush1.msra.mxu0 0.0
        %447 = vmatprep.subr.mxu0 0.0
        %448 = vmatpush1.msra.mxu0 0.0
        %449 = vmatprep.subr.mxu0 0.0
        %450 = vmatpush1.msra.mxu0 0.0
        %451 = vmatprep.subr.mxu0 0.0
        %452 = vmatpush1.msra.mxu0 0.0
        %453 = vmatprep.subr.mxu0 0.0
        %454 = vmatpush1.msra.mxu0 0.0
        %455 = vmatprep.subr.mxu0 0.0
        %456 = vmatpush1.msra.mxu0 0.0
        %457 = vmatprep.subr.mxu0 0.0
        %458 = vmatpush1.msra.mxu0 0.0
        %459 = vmatprep.subr.mxu0 0.0
        %460 = vmatpush1.msra.mxu0 0.0
        %461 = vmatprep.subr.mxu0 0.0
        %462 = vmatpush1.msra.mxu0 0.0
        %463 = vmatprep.subr.mxu0 0.0
        %464 = vmatpush1.msra.mxu0 0.0
        %465 = vmatprep.subr.mxu0 0.0
        %466 = vmatpush1.msra.mxu0 0.0
        %467 = vmatprep.subr.mxu0 0.0
        %468 = vmatpush1.msra.mxu0 0.0
        %469 = vmatprep.subr.mxu0 0.0
        %470 = vmatpush1.msra.mxu0 0.0
        %471 = vmatprep.subr.mxu0 0.0
        %472 = vmatpush1.msra.mxu0 0.0
        %473 = vmatprep.subr.mxu0 0.0
        %474 = vmatpush1.msra.mxu0 0.0
        %475 = vmatprep.subr.mxu0 0.0
        %476 = vmatpush1.msra.mxu0 0.0
        %477 = vmatprep.subr.mxu0 0.0
        %478 = vmatpush1.msra.mxu0 0.0
        %479 = vmatprep.subr.mxu0 0.0
        %480 = vmatpush1.msra.mxu0 0.0
        %481 = vmatprep.subr.mxu0 0.0
        %482 = vmatpush1.msra.mxu0 0.0
        %483 = vmatprep.subr.mxu0 0.0
        %484 = vmatpush1.msra.mxu0 0.0
        %485 = vmatprep.subr.mxu0 0.0
        %486 = vmatpush1.msra.mxu0 0.0
        %487 = vmatprep.subr.mxu0 0.0
        %488 = vmatpush1.msra.mxu0 0.0
        %489 = vmatprep.subr.mxu0 0.0
        %490 = vmatpush1.msra.mxu0 0.0
        %491 = vmatprep.subr.mxu0 0.0
        %492 = vmatpush1.msra.mxu0 0.0
        %493 = vmatprep.subr.mxu0 0.0
        %494 = vmatpush1.msra.mxu0 0.0
        %495 = vmatprep.subr.mxu0 0.0
        %496 = vmatpush1.msra.mxu0 0.0
        %497 = vmatprep.subr.mxu0 0.0
        %498 = vmatpush1.msra.mxu0 0.0
        %499 = vmatprep.subr.mxu0 0.0
        %500 = vmatpush1.msra.mxu0 0.0
        %501 = vmatprep.subr.mxu0 0.0
        %502 = vmatpush1.msra.mxu0 0.0
        %503 = vmatprep.subr.mxu0 0.0
        %504 = vmatpush1.msra.mxu0 0.0
        %505 = vmatprep.mubr.f32.mxu0 0.0
        %506 = vmatmul.mubr.f32.gmra.mrb[0].mxu0 %v427
        %v507 = vpop.f32.mrb[0].mxu0
        %v508 = vadd.f32 0.0, %v507
        %v509 = vpop.f32.mrb[0].mxu0
        %v510 = vadd.f32 0.0, %v509
        %511 = vmatprep.mubr.f32.mxu0 0.0
        %512 = vmatmul.mubr.f32.gmra.mrb[0].mxu0 %v430
        %v513 = vpop.f32.mrb[0].mxu0
        %v514 = vadd.f32 0.0, %v513
        %v515 = vpop.f32.mrb[0].mxu0
        %v516 = vadd.f32 0.0, %v515
        %517 = vmatprep.mubr.f32.mxu0 0.0
        %518 = vmatmul.mubr.f32.gmra.mrb[0].mxu0 %v433
        %v519 = vpop.f32.mrb[0].mxu0
        %v520 = vadd.f32 0.0, %v519
        %v521 = vpop.f32.mrb[0].mxu0
        %v522 = vadd.f32 0.0, %v521
        %523 = vmatprep.mubr.f32.mxu0 0.0
        %524 = vmatmul.mubr.f32.gmra.mrb[0].mxu0 %v436
        %v525 = vpop.f32.mrb[0].mxu0
        %v526 = vadd.f32 0.0, %v525
        %v527 = vpop.f32.mrb[0].mxu0
        %v528 = vadd.f32 0.0, %v527
        %529 = vmatprep.mubr.f32.mxu0 0.0
        %530 = vmatmul.mubr.f32.gmra.mrb[0].mxu0 %v439
        %v531 = vpop.f32.mrb[0].mxu0
        %v532 = vadd.f32 0.0, %v531
        %v533 = vpop.f32.mrb[0].mxu0
        %v534 = vadd.f32 0.0, %v533
        %535 = vdwg.mxu0
        %538 = vrot.lane.b32.xlu0 %v508, 17
        %v539 = vpop.permute.xlu0 %538
        %540 = vrot.lane.b32.xlu0 %v510, 17
        %v541 = vpop.permute.xlu0 %540
        %vm542 = vcmask 138240
        %v543 = vsel %vm542, %v539, %v541
        %v546 = vsel %vm542, 0.0, %v539
        %v547 = vsel %vm416, 1, 0
        %v548 = vsel %vm417, 1, 0
        %vm549 = vcmp.eq.s32.totalorder %v547, 1
        %vm550 = vcmp.eq.s32.totalorder %v548, 1
        %v551 = vsel %vm549, %v546, 0.0
        %v552 = vsel %vm550, %v543, 0.0
        %v553 = vrot.slane %v508, 4
        %v554 = vrot.slane %v510, 4
        %555 = vrot.lane.b32.xlu0 %v553, 16
        %v556 = vpop.permute.xlu0 %555
        %557 = vrot.lane.b32.xlu0 %v554, 16
        %v558 = vpop.permute.xlu0 %557
        %v559 = vsel %vm425, %v556, %v558
        %v562 = vsel %vm425, 0.0, %v556
        %v563 = vadd.f32 %v551, %v562
        %v564 = vadd.f32 %v552, %v559
        %567 = vrot.lane.b32.xlu0 %v514, 15
        %v568 = vpop.permute.xlu0 %567
        %569 = vrot.lane.b32.xlu0 %v516, 15
        %v570 = vpop.permute.xlu0 %569
        %vm571 = vcmask 121856
        %v572 = vsel %vm571, %v568, %v570
        %v575 = vsel %vm571, 0.0, %v568
        %v576 = vsel %vm418, 1, 0
        %v577 = vsel %vm419, 1, 0
        %vm578 = vcmp.eq.s32.totalorder %v576, 1
        %vm579 = vcmp.eq.s32.totalorder %v577, 1
        %v580 = vsel %vm578, %v575, 0.0
        %v581 = vsel %vm579, %v572, 0.0
        %v582 = vadd.f32 %v563, %v580
        %v583 = vadd.f32 %v564, %v581
        %v584 = vrot.slane %v514, 4
        %v585 = vrot.slane %v516, 4
        %586 = vrot.lane.b32.xlu0 %v584, 1
        %v587 = vpop.permute.xlu0 %586
        %588 = vrot.lane.b32.xlu0 %v585, 1
        %v589 = vpop.permute.xlu0 %588
        %vm590 = vcmask 7168
        %v591 = vsel %vm590, %v587, %v589
        %v594 = vsel %vm590, 0.0, %v587
        %v595 = vsel %vm549, %v594, 0.0
        %v596 = vsel %vm550, %v591, 0.0
        %v597 = vadd.f32 %v582, %v595
        %v598 = vadd.f32 %v583, %v596
        %v599 = vadd.f32 %v597, %v520
        %v600 = vadd.f32 %v598, %v522
        %603 = vrot.lane.b32.xlu0 %v520, 127
        %v604 = vpop.permute.xlu0 %603
        %605 = vrot.lane.b32.xlu0 %v522, 127
        %v606 = vpop.permute.xlu0 %605
        %vm607 = vcmask 1039360
        %v608 = vsel %vm607, %v604, %v606
        %v611 = vsel %vm607, %v606, 0.0
        %v612 = vsel %vm578, %v608, 0.0
        %v613 = vsel %vm579, %v611, 0.0
        %v616 = vrot.slane %v612, 4
        %v617 = vrot.slane %v613, 4
        %v620 = vadd.f32 %v599, %v616
        %v621 = vadd.f32 %v600, %v617
        %624 = vrot.lane.b32.xlu0 %v526, 113
        %v625 = vpop.permute.xlu0 %624
        %626 = vrot.lane.b32.xlu0 %v528, 113
        %v627 = vpop.permute.xlu0 %626
        %vm628 = vcmask 924672
        %v629 = vsel %vm628, %v625, %v627
        %v632 = vsel %vm628, %v627, 0.0
        %v633 = vsel %vm549, %v629, 0.0
        %v634 = vsel %vm550, %v632, 0.0
        %v635 = vadd.f32 %v620, %v633
        %v636 = vadd.f32 %v621, %v634
        %637 = vrot.lane.b32.xlu0 %v526, 112
        %v638 = vpop.permute.xlu0 %637
        %639 = vrot.lane.b32.xlu0 %v528, 112
        %v640 = vpop.permute.xlu0 %639
        %vm641 = vcmask 916480
        %v642 = vsel %vm641, %v638, %v640
        %v644 = vsel %vm641, %v640, 0.0
        %v646 = vrot.slane %v642, 4
        %v647 = vrot.slane %v644, 4
        %v650 = vadd.f32 %v635, %v646
        %v651 = vadd.f32 %v636, %v647
        %654 = vrot.lane.b32.xlu0 %v532, 111
        %v655 = vpop.permute.xlu0 %654
        %656 = vrot.lane.b32.xlu0 %v534, 111
        %v657 = vpop.permute.xlu0 %656
        %vm658 = vcmask 908288
        %v659 = vsel %vm658, %v655, %v657
        %v662 = vsel %vm658, %v657, 0.0
        %v663 = vsel %vm578, %v659, 0.0
        %v664 = vsel %vm579, %v662, 0.0
        %v665 = vadd.f32 %v650, %v663
        %v666 = vadd.f32 %v651, %v664
        %s667 = sld [smem:[#allocation5]]
        %v668 = vstv %s667
        %v669 = vadd.f32 %v665, %v668
        %v670 = vadd.f32 %v666, %v668
        %v671 = vmax.f32 %v669, 0.0
        %v672 = vmax.f32 %v670, 0.0
        %675 = vrot.lane.b32.xlu0 %v671, 17
        %v676 = vpop.permute.xlu0 %675
        %677 = vrot.lane.b32.xlu0 %v672, 17
        %v678 = vpop.permute.xlu0 %677
        %v679 = vsel %vm542, %v676, %v678
        %v682 = vsel %vm542, 0.0, %v676
        %v683 = vsel %vm549, %v682, 0.0
        %v684 = vsel %vm550, %v679, 0.0
        %685 = vrot.lane.b32.xlu0 %v671, 16
        %v686 = vpop.permute.xlu0 %685
        %687 = vrot.lane.b32.xlu0 %v672, 16
        %v688 = vpop.permute.xlu0 %687
        %v689 = vsel %vm425, %v686, %v688
        %v691 = vsel %vm425, 0.0, %v686
        %692 = vrot.lane.b32.xlu0 %v671, 15
        %v693 = vpop.permute.xlu0 %692
        %694 = vrot.lane.b32.xlu0 %v672, 15
        %v695 = vpop.permute.xlu0 %694
        %v696 = vsel %vm571, %v693, %v695
        %v699 = vsel %vm571, 0.0, %v693
        %v700 = vsel %vm578, %v699, 0.0
        %v701 = vsel %vm579, %v696, 0.0
        %702 = vrot.lane.b32.xlu0 %v671, 1
        %v703 = vpop.permute.xlu0 %702
        %704 = vrot.lane.b32.xlu0 %v672, 1
        %v705 = vpop.permute.xlu0 %704
        %v706 = vsel %vm590, %v703, %v705
        %v709 = vsel %vm590, 0.0, %v703
        %v710 = vsel %vm549, %v709, 0.0
        %v711 = vsel %vm550, %v706, 0.0
        %712 = vrot.lane.b32.xlu0 %v671, 127
        %v713 = vpop.permute.xlu0 %712
        %714 = vrot.lane.b32.xlu0 %v672, 127
        %v715 = vpop.permute.xlu0 %714
        %v716 = vsel %vm607, %v713, %v715
        %v719 = vsel %vm607, %v715, 0.0
        %v720 = vsel %vm578, %v716, 0.0
        %v721 = vsel %vm579, %v719, 0.0
        %722 = vrot.lane.b32.xlu0 %v671, 113
        %v723 = vpop.permute.xlu0 %722
        %724 = vrot.lane.b32.xlu0 %v672, 113
        %v725 = vpop.permute.xlu0 %724
        %v726 = vsel %vm628, %v723, %v725
        %v729 = vsel %vm628, %v725, 0.0
        %v730 = vsel %vm549, %v726, 0.0
        %v731 = vsel %vm550, %v729, 0.0
        %732 = vrot.lane.b32.xlu0 %v671, 112
        %v733 = vpop.permute.xlu0 %732
        %734 = vrot.lane.b32.xlu0 %v672, 112
        %v735 = vpop.permute.xlu0 %734
        %v736 = vsel %vm641, %v733, %v735
        %v738 = vsel %vm641, %v735, 0.0
        %739 = vrot.lane.b32.xlu0 %v671, 111
        %v740 = vpop.permute.xlu0 %739
        %741 = vrot.lane.b32.xlu0 %v672, 111
        %v742 = vpop.permute.xlu0 %741
        %v743 = vsel %vm658, %v740, %v742
        %v746 = vsel %vm658, %v742, 0.0
        %v747 = vsel %vm578, %v743, 0.0
        %v748 = vsel %vm579, %v746, 0.0
        %v750 = vrot.slane %v691, 4
        %v751 = vrot.slane %v689, 4
        %v756 = vrot.slane %v710, 4
        %v757 = vrot.slane %v711, 4
        %v762 = vrot.slane %v720, 4
        %v763 = vrot.slane %v721, 4
        %v767 = vrot.slane %v736, 4
        %v768 = vrot.slane %v738, 4
        %v771 = vsel %vm303, %v683, %v750
        %v772 = vsel %vm303, %v684, %v751
        %v773 = vsel %vm303, %v700, %v756
        %v774 = vsel %vm303, %v701, %v757
        %v775 = vsel %vm303, %v671, %v762
        %v776 = vsel %vm303, %v672, %v763
        %v777 = vsel %vm303, %v730, %v767
        %v778 = vsel %vm303, %v731, %v768
        %v779 = vld [vmem:[#allocation2] sm:$0xff]
        %v780 = vld [vmem:[#allocation2 + $0x8] sm:$0xff]
        %s781 = sld [smem:[#allocation5 + $0x1]]
        %v782 = vstv %s781
        %vm783 = vcmask 293888
        %v785 = vsel %vm783, %v779, 0
        %v788 = vsel %vm783, %v780, 0
        %v791 = vsel %vm303, %v747, 0
        %v794 = vsel %vm303, %v748, 0
        %796 = vmatprep.subr.mxu0 %v772
        %797 = vmatpush1.msra.mxu0 %v771
        %798 = vmatprep.subr.mxu0 %v774
        %799 = vmatpush1.msra.mxu0 %v773
        %800 = vmatprep.subr.mxu0 %v776
        %801 = vmatpush1.msra.mxu0 %v775
        %802 = vmatprep.subr.mxu0 %v778
        %803 = vmatpush1.msra.mxu0 %v777
        %804 = vmatprep.subr.mxu0 %v794
        %805 = vmatpush1.msra.mxu0 %v791
        %806 = vmatprep.subr.mxu0 0.0
        %807 = vmatpush1.msra.mxu0 0.0
        %808 = vmatprep.subr.mxu0 0.0
        %809 = vmatpush1.msra.mxu0 0.0
        %810 = vmatprep.subr.mxu0 0.0
        %811 = vmatpush1.msra.mxu0 0.0
        %812 = vmatprep.subr.mxu0 0.0
        %813 = vmatpush1.msra.mxu0 0.0
        %814 = vmatprep.subr.mxu0 0.0
        %815 = vmatpush1.msra.mxu0 0.0
        %816 = vmatprep.subr.mxu0 0.0
        %817 = vmatpush1.msra.mxu0 0.0
        %818 = vmatprep.subr.mxu0 0.0
        %819 = vmatpush1.msra.mxu0 0.0
        %820 = vmatprep.subr.mxu0 0.0
        %821 = vmatpush1.msra.mxu0 0.0
        %822 = vmatprep.subr.mxu0 0.0
        %823 = vmatpush1.msra.mxu0 0.0
        %824 = vmatprep.subr.mxu0 0.0
        %825 = vmatpush1.msra.mxu0 0.0
        %826 = vmatprep.subr.mxu0 0.0
        %827 = vmatpush1.msra.mxu0 0.0
        %828 = vmatprep.subr.mxu0 0.0
        %829 = vmatpush1.msra.mxu0 0.0
        %830 = vmatprep.subr.mxu0 0.0
        %831 = vmatpush1.msra.mxu0 0.0
        %832 = vmatprep.subr.mxu0 0.0
        %833 = vmatpush1.msra.mxu0 0.0
        %834 = vmatprep.subr.mxu0 0.0
        %835 = vmatpush1.msra.mxu0 0.0
        %836 = vmatprep.subr.mxu0 0.0
        %837 = vmatpush1.msra.mxu0 0.0
        %838 = vmatprep.subr.mxu0 0.0
        %839 = vmatpush1.msra.mxu0 0.0
        %840 = vmatprep.subr.mxu0 0.0
        %841 = vmatpush1.msra.mxu0 0.0
        %842 = vmatprep.subr.mxu0 0.0
        %843 = vmatpush1.msra.mxu0 0.0
        %844 = vmatprep.subr.mxu0 0.0
        %845 = vmatpush1.msra.mxu0 0.0
        %846 = vmatprep.subr.mxu0 0.0
        %847 = vmatpush1.msra.mxu0 0.0
        %848 = vmatprep.subr.mxu0 0.0
        %849 = vmatpush1.msra.mxu0 0.0
        %850 = vmatprep.subr.mxu0 0.0
        %851 = vmatpush1.msra.mxu0 0.0
        %852 = vmatprep.subr.mxu0 0.0
        %853 = vmatpush1.msra.mxu0 0.0
        %854 = vmatprep.subr.mxu0 0.0
        %855 = vmatpush1.msra.mxu0 0.0
        %856 = vmatprep.subr.mxu0 0.0
        %857 = vmatpush1.msra.mxu0 0.0
        %858 = vmatprep.subr.mxu0 0.0
        %859 = vmatpush1.msra.mxu0 0.0
        %860 = vmatprep.mubr.f32.mxu0 0.0
        %861 = vmatmul.mubr.f32.gmra.mrb[0].mxu0 %v785
        %v862 = vpop.f32.mrb[0].mxu0
        %v863 = vadd.f32 %v782, %v862
        %v864 = vpop.f32.mrb[0].mxu0
        %v865 = vadd.f32 %v782, %v864
        %866 = vmatprep.mubr.f32.mxu0 0.0
        %867 = vmatmul.mubr.f32.gmra.mrb[0].mxu0 %v788
        %v868 = vpop.f32.mrb[0].mxu0
        %v869 = vadd.f32 %v782, %v868
        %v870 = vpop.f32.mrb[0].mxu0
        %v871 = vadd.f32 %v782, %v870
        %872 = vdwg.mxu0
        %873 = vst [vmem:[%s278] sm:$0xff] %v863
        %874 = vst [vmem:[%s278 + $0x8] sm:$0xff] %v865
        %875 = vst [vmem:[%s278 + $0x10] sm:$0xff] %v869
        %876 = vst [vmem:[%s278 + $0x18] sm:$0xff] %v871
        %p877 = scmp.lt.s32.totalorder %s19, 1
        %s878 = scalar_select %p877, %s19, 1
        %s879 = smul.addr %s878, 4
        %s880 = smul.addr %s879, 8
        %s881 = scalar_lea.vmem %s6, %s880
        // Predicated region
        $region53: #{upconv_block_forward.1} parent=43 // pred_check
          %p882 = pneg %p168
        $region54: #{upconv_block_forward.1} parent=43 // pred_check_branch
          %884 = sbr.rel (%p882) target = $region56
        $region55: #{upconv_block_forward.1} parent=43 // pred_region
          _
        $region56: #{upconv_block_forward.1} parent=43 // pred_fallthru
          _
      $region44: #{upconv_block_forward.1} parent=5 // pred_fallthru
        _
      %p885 = scmp.le.s32.totalorder 2, %s14
      // Predicated region
      $region57: #{upconv_block_forward.1} parent=5 // pred_check
        %p886 = pneg %p885
      $region58: #{upconv_block_forward.1} parent=5 // pred_check_branch
        %888 = sbr.rel (%p886) target = $region60
      $region59: #{upconv_block_forward.1} parent=5 // pred_region
        %s889 = ssub.s32 %s14, 2
        // Predicated region
        $region61: #{upconv_block_forward.1} parent=59 // pred_check
          %p890 = pneg %p174
        $region62: #{upconv_block_forward.1} parent=59 // pred_check_branch
          %892 = sbr.rel (%p890) target = $region64
        $region63: #{upconv_block_forward.1} parent=59 // pred_region
          %p893 = scmp.lt.s32.totalorder %s20, 1
          %s894 = scalar_select %p893, %s20, 1
          %s895 = smul.addr %s894, 4
          %s896 = smul.addr %s895, 8
          %s897 = scalar_lea.vmem %s6, %s896
        $region64: #{upconv_block_forward.1} parent=59 // pred_fallthru
          _
      $region60: #{upconv_block_forward.1} parent=5 // pred_fallthru
        _
    $region6: #{upconv_block_forward.1} parent=1 // loop_footer
      %s18 = sadd.s32 1, %s14
    $region7: #{upconv_block_forward.1} parent=1 // loop_footer_branch
      %13 = sbr.rel target = $region3
    $region8: #{upconv_block_forward.1} parent=1 // loop_exit
      _
    %898 = vsyncpa [#allocation3], 1
    %s899 = scalar_lea.sflag [#allocation3], 1
    %900 = vsyncpa %s899, 1
    %901 = vsyncpa [#allocation4], 1
    %s902 = scalar_lea.sflag [#allocation4], 1
    %903 = vsyncpa %s902, 1

</llo_original>
